<compile_context>
chip_gen: v7x
topology: tpu7x:2x2x1
jax: 0.10.0
libtpu: 0.0.40
codegen_flags: <defaults>
</compile_context>

<pallas_src>
import functools

import jax
import jax.numpy as jnp
from jax.experimental import pallas as pl
from jax.experimental.pallas import tpu as pltpu


# Conservative per-kernel VMEM budget for the pipelined tiles (double-buffered
# x, W, bias, out). Fits v7x (64 MiB physical); v5e/v6e simply have headroom.
_VMEM_TILE_BUDGET = 24 * 1024 * 1024
# Below this many FLOPs, Pallas launch/per-step overhead dwarfs the compute.
_FALLBACK_FLOPS = 1 << 22


def _linear_decoder_kernel(x_ref, w_ref, b_ref, o_ref):
    # x_ref : [TM, K]    batch tile
    # w_ref : [TN, K]    weight tile in PyTorch layout (out_dim, latent_dim)
    # b_ref : [1,  TN]   bias tile
    # o_ref : [TM, TN]
    acc = jax.lax.dot_general(
        x_ref[...],
        w_ref[...],
        dimension_numbers=(((1,), (1,)), ((), ())),  # contract K of both => x @ W.T
        preferred_element_type=jnp.float32,
    )
    o_ref[...] = (acc + b_ref[...].astype(jnp.float32)).astype(o_ref.dtype)


def _round_down(x, m):
    return max(m, (x // m) * m)


@functools.partial(jax.jit, static_argnames=("block_m", "block_n"))
def linear_decoder(x, weight, bias, *, block_m=None, block_n=None):
    """y = x @ weight.T + bias   (PyTorch nn.Linear semantics).

    x      : [B, latent_dim]
    weight : [out_dim, latent_dim]   (PyTorch layout, consumed as-is)
    bias   : [out_dim]
    returns: [B, out_dim]  (dtype of x)
    """
    B, K = x.shape
    N, K2 = weight.shape
    assert K == K2, "latent_dim mismatch"
    assert bias.shape == (N,), "bias shape mismatch"
    out_dtype = x.dtype

    # ---- small-problem fallback: XLA's fused matmul is strictly faster ----
    if 2 * B * K * N < _FALLBACK_FLOPS:
        y = jnp.dot(x, weight.T, preferred_element_type=jnp.float32)
        return (y + bias.astype(jnp.float32)).astype(out_dtype)

    # ---- tile selection (M x N grid, K unsplit for typical latent dims) ----
    if block_n is None:
        block_n = N if N <= 512 else 512            # multiple of 128 when < N
    if block_m is None:
        bm_cap = 512 if x.dtype == jnp.bfloat16 else 256
        block_m = B if B <= bm_cap else bm_cap      # multiple of 8 when < B

    x_bytes = jnp.dtype(x.dtype).itemsize
    w_bytes = jnp.dtype(weight.dtype).itemsize
    o_bytes = jnp.dtype(out_dtype).itemsize

    def tile_bytes(bm, bn):
        # Double-buffered pipelined streams (x, W, bias, out).
        return 2 * (bm * K * x_bytes + bn * K * w_bytes
                    + bn * w_bytes + bm * bn * o_bytes)

    # Shrink tiles until the double-buffered working set fits the budget,
    # keeping block_n a multiple of 128 and block_m a multiple of 8.
    while tile_bytes(block_m, block_n) > _VMEM_TILE_BUDGET:
        if block_n > 128:
            block_n = _round_down(block_n // 2, 128)
        elif block_m > 8:
            block_m = _round_down(block_m // 2, 8)
        else:
            break

    vmem_limit = int(min(96 * 2**20,
                         max(32 * 2**20, (tile_bytes(block_m, block_n) * 3) // 2)))

    # Grid: N tiles outer, M tiles inner -> weight block index is constant
    # across the inner loop, so each weight tile is fetched from HBM once.
    grid = (pl.cdiv(N, block_n), pl.cdiv(B, block_m))

    cost = pl.CostEstimate(
        flops=2 * B * K * N,
        transcendentals=0,
        bytes_accessed=(B * K * x_bytes + N * K * w_bytes
                        + N * w_bytes + B * N * o_bytes),
    )

    b2 = bias.reshape(1, N)

    # Note: the grid-invariant weight/bias tiles could be single-buffered
    # (pipeline_mode=pl.Buffered(1)) to reclaim VMEM; left at the default for
    # maximum compatibility — the budget above already accounts for 2 buffers.
    return pl.pallas_call(
        _linear_decoder_kernel,
        out_shape=jax.ShapeDtypeStruct((B, N), out_dtype),
        grid_spec=pltpu.PrefetchScalarGridSpec(
            num_scalar_prefetch=0,
            grid=grid,
            in_specs=[
                pl.BlockSpec((block_m, K), lambda j, i: (i, 0)),   # x row tile
                pl.BlockSpec((block_n, K), lambda j, i: (j, 0)),   # weight tile [TN, K]
                pl.BlockSpec((1, block_n), lambda j, i: (0, j)),   # bias tile
            ],
            out_specs=pl.BlockSpec((block_m, block_n), lambda j, i: (i, j)),
        ),
        compiler_params=pltpu.CompilerParams(
            dimension_semantics=("parallel", "parallel"),
            vmem_limit_bytes=vmem_limit,
        ),
        cost_estimate=cost,
    )(x, weight, b2)


if __name__ == "__main__":
    key = jax.random.PRNGKey(0)

    def make_inputs(k, batch, latent_dim, out_dim, dtype=jnp.float32):
        k_x, k_w, k_b = jax.random.split(k, 3)
        bound = 1.0 / (latent_dim ** 0.5)
        x = jax.random.normal(k_x, (batch, latent_dim), dtype=dtype)
        w = jax.random.uniform(k_w, (out_dim, latent_dim),
                               minval=-bound, maxval=bound, dtype=dtype)
        b = jax.random.uniform(k_b, (out_dim,),
                               minval=-bound, maxval=bound, dtype=dtype)
        return x, w, b

    k1, k2 = jax.random.split(key)

    # 1) Pallas path: multi-step (N_tiles x M_tiles) grid exercising tiling,
    #    pipelining and lane-dense stores.
    x, w, b = make_inputs(k1, batch=512, latent_dim=256, out_dim=1024)
    y = jax.block_until_ready(linear_decoder(x, w, b))
    y_ref = jnp.dot(x, w.T, preferred_element_type=jnp.float32) + b
    assert y.shape == (512, 1024)
    # Loose-ish tolerance: covers possible MXU precision-path differences
    # between Mosaic's and XLA's f32 matmul lowerings.
    assert jnp.allclose(y, y_ref, atol=2e-2, rtol=2e-2), "pallas path mismatch"

    # 2) Tiny problem (the original demo shape): intentionally falls back to
    #    plain XLA — Pallas launch overhead would dominate here.
    xs, ws, bs = make_inputs(k2, batch=8, latent_dim=32, out_dim=64)
    ys = jax.block_until_ready(linear_decoder(xs, ws, bs))
    ys_ref = xs @ ws.T + bs
    assert ys.shape == (8, 64)
    assert jnp.allclose(ys, ys_ref, atol=1e-4, rtol=1e-4), "fallback path mismatch"

    print("KERNEL_OK")
</pallas_src>

<mosaic_0001>
module attributes {stable_mosaic.version = 11 : i64} {
  func.func @_linear_decoder_kernel(%arg0: i32, %arg1: i32, %arg2: memref<256x256xf32, #tpu.memory_space<vmem>>, %arg3: memref<512x256xf32, #tpu.memory_space<vmem>>, %arg4: memref<1x512xf32, #tpu.memory_space<vmem>>, %arg5: memref<256x512xf32, #tpu.memory_space<vmem>>) attributes {dimension_semantics = [#tpu.dimension_semantics<parallel>, #tpu.dimension_semantics<parallel>], iteration_bounds = array<i64: 2, 2>, scalar_prefetch = 0 : i64, scratch_operands = 0 : i64, tpu.core_type = #tpu.core_type<tc>, window_params = [{transform_indices = @transform_0, window_bounds = array<i64: 256, 256>}, {transform_indices = @transform_1, window_bounds = array<i64: 512, 256>}, {transform_indices = @transform_2, window_bounds = array<i64: 1, 512>}, {transform_indices = @transform_3, window_bounds = array<i64: 256, 512>}]} {
    %c0 = arith.constant 0 : index
    %c0_0 = arith.constant 0 : index
    %0 = vector.load %arg2[%c0, %c0_0] : memref<256x256xf32, #tpu.memory_space<vmem>>, vector<256x256xf32>
    %c0_1 = arith.constant 0 : index
    %c0_2 = arith.constant 0 : index
    %1 = vector.load %arg3[%c0_1, %c0_2] : memref<512x256xf32, #tpu.memory_space<vmem>>, vector<512x256xf32>
    %cst = arith.constant dense<0.000000e+00> : vector<256x512xf32>
    %2 = tpu.matmul %0, %1, %cst {dimension_numbers = #tpu.dot_dimension_numbers<[1], [1], [0], [0], [0, 0, 1, 0], [], []>} : vector<256x256xf32>, vector<512x256xf32>, vector<256x512xf32> -> vector<256x512xf32>
    %c0_3 = arith.constant 0 : index
    %c0_4 = arith.constant 0 : index
    %3 = vector.load %arg4[%c0_3, %c0_4] : memref<1x512xf32, #tpu.memory_space<vmem>>, vector<1x512xf32>
    %4 = vector.broadcast %3 : vector<1x512xf32> to vector<256x512xf32>
    %5 = arith.addf %2, %4 : vector<256x512xf32>
    %c0_5 = arith.constant 0 : index
    %c0_6 = arith.constant 0 : index
    %6 = vector.load %arg5[%c0_5, %c0_6] : memref<256x512xf32, #tpu.memory_space<vmem>>, vector<256x512xf32>
    tpu.vector_store %arg5[%c0_5, %c0_6], %5 {strides = array<i32>} : memref<256x512xf32, #tpu.memory_space<vmem>>, vector<256x512xf32>,
    return
  }
  func.func @transform_0(%arg0: i32, %arg1: i32) -> (i32, i32) {
    %c0_i32 = arith.constant 0 : i32
    %c0_i32_0 = arith.constant 0 : i32
    return %arg1, %c0_i32 : i32, i32
  }
  func.func @transform_1(%arg0: i32, %arg1: i32) -> (i32, i32) {
    %c0_i32 = arith.constant 0 : i32
    %c0_i32_0 = arith.constant 0 : i32
    return %arg0, %c0_i32 : i32, i32
  }
  func.func @transform_2(%arg0: i32, %arg1: i32) -> (i32, i32) {
    %c0_i32 = arith.constant 0 : i32
    %c0_i32_0 = arith.constant 0 : i32
    return %c0_i32, %arg0 : i32, i32
  }
  func.func @transform_3(%arg0: i32, %arg1: i32) -> (i32, i32) {
    %c0_i32 = arith.constant 0 : i32
    return %arg1, %arg0 : i32, i32
  }
}

</mosaic_0001>

<llo_original>
// kernel: linear_decoder.1
$region0: #{linear_decoder.1}
  #allocation0 [shape = 'u32[]', space=smem, size = 0x4, offset = 0x4, fixed_abs, tag = 'smem constant byte address 0x4 - core index']
  #allocation1 [shape = 'u32[144,128]{1,0:T(1,128)}', space=vmem, size = 0x12000, scoped, tag = 'internal scratch']
  %s0 = inlined_call_operand.hbm [shape: f32[512,256], index: 0, kind: input, shape index: {}]
  %s1 = inlined_call_operand.hbm [shape: f32[1024,256], index: 1, kind: input, shape index: {}]
  %s2 = inlined_call_operand.hbm [shape: f32[1,1024], index: 2, kind: input, shape index: {}]
  %s3 = inlined_call_operand.hbm [shape: f32[512,1024], index: 3, kind: output, shape index: {}]
  %s4 = sld [smem:[#allocation0]]
  $region57: #{linear_decoder.1} parent=0
    _
  %s6 = ssub.s32 1, %s4
  %s7 = scalar_select 0, %s6, %s4
  $region1: #{linear_decoder.1} parent=0
    #allocation2 [shape = 'u8[524288]{0}', space=vmem, size = 0x80000, scoped, tag = 'input window, operand 0']
    #allocation3 [shape = 's32[2]{0}', space=sflag, size = 0x8, scoped, tag = 'scoped memory for linear_decoder.1']
    #allocation4 [shape = 's32[2]{0}', space=sflag, size = 0x8, scoped, tag = 'scoped memory for linear_decoder.1']
    #allocation5 [shape = 'u8[1048576]{0}', space=vmem, size = 0x100000, scoped, tag = 'input window, operand 1']
    #allocation6 [shape = 's32[2]{0}', space=sflag, size = 0x8, scoped, tag = 'scoped memory for linear_decoder.1']
    #allocation7 [shape = 'u8[4096]{0}', space=vmem, size = 0x1000, scoped, tag = 'input window, operand 2']
    #allocation8 [shape = 'u8[1048576]{0}', space=vmem, size = 0x100000, scoped, tag = 'output window, operand 0']
    %8 = vsyncpa [#allocation3], 0
    %s9 = scalar_lea.sflag [#allocation3], 1
    %10 = vsyncpa %s9, 0
    %11 = vsyncpa [#allocation6], 0
    %s12 = scalar_lea.sflag [#allocation6], 1
    %13 = vsyncpa %s12, 0
    %14 = vsyncpa [#allocation4], 0
    %s15 = scalar_lea.sflag [#allocation4], 1
    %16 = vsyncpa %s15, 0
    loop: start=0, step=1, limit=6
    $region2: #{linear_decoder.1} parent=1 // loop_pre_header
      _
    $region3: #{linear_decoder.1} parent=1 // loop_header
      %s18 = sphi 0, %s22
      %p19 = scmp.ge.s32.totalorder %s18, 6
      %s25 = sphi 0, %s37
      %s26 = sphi 0, %s33
      %s27 = sphi 0, %s25
      %s28 = sphi 0, %s26
      %s29 = sphi 0, %s27
      %s30 = sphi 0, %s28
      %s40 = sphi 0, %s42
      %s43 = sphi 0, %s40
      %s44 = sphi 0, %s43
      %s60 = sphi 0, %s44
      %s66 = sphi 0, %s68
      %s69 = sphi 0, %s66
      %s70 = sphi 0, %s69
      %s86 = sphi 0, %s70
      %s92 = sphi 0, %s94
      %s95 = sphi 0, %s92
      %s96 = sphi 0, %s95
      %s112 = sphi 0, %s96
      %s120 = sphi 0, %s122
      %s123 = sphi 0, %s120
      %s124 = sphi 0, %s123
      %s140 = sphi 0, %s124
    $region4: #{linear_decoder.1} parent=1 // loop_header_branch
      %21 = sbr.rel (%p19) target = $region8
    $region5: #{linear_decoder.1} parent=1 // loop_body
      %s23 = ssub.s32 %s18, 1
      %s24 = ssub.s32 %s18, 2
      %s31 = sadd.s32 1, %s26
      %p32 = scmp.ge.s32.totalorder %s31, 2
      %s33 = scalar_select %p32, 0, %s31
      %s34 = sadd.s32 1, %s25
      %s35 = scalar_select %p32, %s34, %s25
      %p36 = scmp.ge.s32.totalorder %s35, 2
      %s37 = scalar_select %p36, 0, %s35
      %s38 = ssub.s32 %s26, %s33
      %p39 = scmp.eq.s32.totalorder %s38, 0
      %s41 = sadd.s32 %s40, 1
      %s42 = scalar_select %p39, %s40, %s41
      %p45 = pneg %p39
      %p46 = scmp.eq.s32.totalorder %s18, 3
      %p47 = por %p45, %p46
      %p48 = scmp.ne.s32.totalorder %s40, %s43
      %p49 = scmp.eq.s32.totalorder %s18, 0
      %p50 = por %p48, %p49
      %p51 = scmp.ne.s32.totalorder %s40, %s43
      %p52 = scmp.eq.s32.totalorder %s23, 3
      %p53 = por %p51, %p52
      %p54 = scmp.ne.s32.totalorder %s43, %s44
      %p55 = scmp.eq.s32.totalorder %s23, 0
      %p56 = por %p54, %p55
      %p57 = scmp.ne.s32.totalorder %s43, %s44
      %p58 = scmp.eq.s32.totalorder %s24, 3
      %p59 = por %p57, %p58
      %p61 = scmp.ne.s32.totalorder %s44, %s60
      %p62 = scmp.eq.s32.totalorder %s24, 0
      %p63 = por %p61, %p62
      %s64 = ssub.s32 %s25, %s37
      %p65 = scmp.eq.s32.totalorder %s64, 0
      %s67 = sadd.s32 %s66, 1
      %s68 = scalar_select %p65, %s66, %s67
      %p71 = pneg %p65
      %p72 = scmp.eq.s32.totalorder %s18, 3
      %p73 = por %p71, %p72
      %p74 = scmp.ne.s32.totalorder %s66, %s69
      %p75 = scmp.eq.s32.totalorder %s18, 0
      %p76 = por %p74, %p75
      %p77 = scmp.ne.s32.totalorder %s66, %s69
      %p78 = scmp.eq.s32.totalorder %s23, 3
      %p79 = por %p77, %p78
      %p80 = scmp.ne.s32.totalorder %s69, %s70
      %p81 = scmp.eq.s32.totalorder %s23, 0
      %p82 = por %p80, %p81
      %p83 = scmp.ne.s32.totalorder %s69, %s70
      %p84 = scmp.eq.s32.totalorder %s24, 3
      %p85 = por %p83, %p84
      %p87 = scmp.ne.s32.totalorder %s70, %s86
      %p88 = scmp.eq.s32.totalorder %s24, 0
      %p89 = por %p87, %p88
      %s90 = ssub.s32 %s25, %s37
      %p91 = scmp.eq.s32.totalorder %s90, 0
      %s93 = sadd.s32 %s92, 1
      %s94 = scalar_select %p91, %s92, %s93
      %p97 = pneg %p91
      %p98 = scmp.eq.s32.totalorder %s18, 3
      %p99 = por %p97, %p98
      %p100 = scmp.ne.s32.totalorder %s92, %s95
      %p101 = scmp.eq.s32.totalorder %s18, 0
      %p102 = por %p100, %p101
      %p103 = scmp.ne.s32.totalorder %s92, %s95
      %p104 = scmp.eq.s32.totalorder %s23, 3
      %p105 = por %p103, %p104
      %p106 = scmp.ne.s32.totalorder %s95, %s96
      %p107 = scmp.eq.s32.totalorder %s23, 0
      %p108 = por %p106, %p107
      %p109 = scmp.ne.s32.totalorder %s95, %s96
      %p110 = scmp.eq.s32.totalorder %s24, 3
      %p111 = por %p109, %p110
      %p113 = scmp.ne.s32.totalorder %s96, %s112
      %p114 = scmp.eq.s32.totalorder %s24, 0
      %p115 = por %p113, %p114
      %s116 = ssub.s32 %s26, %s33
      %s117 = ssub.s32 %s25, %s37
      %s118 = sor.u32 %s116, %s117
      %p119 = scmp.eq.s32.totalorder %s118, 0
      %s121 = sadd.s32 %s120, 1
      %s122 = scalar_select %p119, %s120, %s121
      %p125 = pneg %p119
      %p126 = scmp.eq.s32.totalorder %s18, 3
      %p127 = por %p125, %p126
      %p128 = scmp.ne.s32.totalorder %s120, %s123
      %p129 = scmp.eq.s32.totalorder %s18, 0
      %p130 = por %p128, %p129
      %p131 = scmp.ne.s32.totalorder %s120, %s123
      %p132 = scmp.eq.s32.totalorder %s23, 3
      %p133 = por %p131, %p132
      %p134 = scmp.ne.s32.totalorder %s123, %s124
      %p135 = scmp.eq.s32.totalorder %s23, 0
      %p136 = por %p134, %p135
      %p137 = scmp.ne.s32.totalorder %s123, %s124
      %p138 = scmp.eq.s32.totalorder %s24, 3
      %p139 = por %p137, %p138
      %p141 = scmp.ne.s32.totalorder %s124, %s140
      %p142 = scmp.eq.s32.totalorder %s24, 0
      %p143 = por %p141, %p142
      %p144 = scmp.le.s32.totalorder 1, %s18
      %p145 = scmp.lt.s32.totalorder %s18, 5
      %p146 = pnand %p144, %p145
      %p147 = pneg %p146
      // Predicated region
      $region9: #{linear_decoder.1} parent=5 // pred_check
        _
      $region10: #{linear_decoder.1} parent=5 // pred_check_branch
        %149 = sbr.rel (%p146) target = $region12
      $region11: #{linear_decoder.1} parent=5 // pred_region
        %s150 = ssub.s32 %s18, 1
      $region12: #{linear_decoder.1} parent=5 // pred_fallthru
        _
      %p151 = scmp.lt.s32.totalorder %s18, 4
      // Predicated region
      $region13: #{linear_decoder.1} parent=5 // pred_check
        %p152 = pneg %p151
      $region14: #{linear_decoder.1} parent=5 // pred_check_branch
        %154 = sbr.rel (%p152) target = $region16
      $region15: #{linear_decoder.1} parent=5 // pred_region
        // Predicated region
        $region17: #{linear_decoder.1} parent=15 // pred_check
          %p155 = pneg %p50
        $region18: #{linear_decoder.1} parent=15 // pred_check_branch
          %157 = sbr.rel (%p155) target = $region20
        $region19: #{linear_decoder.1} parent=15 // pred_region
          %s158 = sand.u32 %s40, 1
          %s159 = scalar_lea.sflag [#allocation3], %s158
          %s160 = sand.u32 %s40, 1
          %s161 = smul.addr %s160, 512
          %s162 = scalar_lea.vmem [#allocation2], %s161
          %s163 = smul.u32 32, %s26
          %s165 = ssub.s32 8192, 8192
          %166 = vsyncadd %s159, %s165
          %s167 = smul.addr %s163, 2
          %s168 = smul.addr %s167, 128
          %s169 = scalar_lea.hbm %s0, %s168
          %s170 = sshll.u32 %s162, 4
          %s171 = int_to_ptr.vmem [resolvable:$true] %s170
          %176 = dma.hbm_to_vmem [thread:$0]  %s169, 8192, %s171, %s159, 256, 256, 16
        $region20: #{linear_decoder.1} parent=15 // pred_fallthru
          _
        // Predicated region
        $region21: #{linear_decoder.1} parent=15 // pred_check
          %p177 = pneg %p76
        $region22: #{linear_decoder.1} parent=15 // pred_check_branch
          %179 = sbr.rel (%p177) target = $region24
        $region23: #{linear_decoder.1} parent=15 // pred_region
          %s180 = sand.u32 %s18, 1
          %s181 = scalar_lea.sflag [#allocation6], %s180
          %s182 = sand.u32 %s66, 1
          %s183 = smul.addr %s182, 1024
          %s184 = scalar_lea.vmem [#allocation5], %s183
          %s185 = smul.u32 64, %s25
          %s187 = ssub.s32 16384, 16384
          %188 = vsyncadd %s181, %s187
          %s189 = smul.addr %s185, 2
          %s190 = smul.addr %s189, 128
          %s191 = scalar_lea.hbm %s1, %s190
          %s192 = sshll.u32 %s184, 4
          %s193 = int_to_ptr.vmem [resolvable:$true] %s192
          %198 = dma.hbm_to_vmem [thread:$0]  %s191, 16384, %s193, %s181, 256, 256, 16
        $region24: #{linear_decoder.1} parent=15 // pred_fallthru
          _
        // Predicated region
        $region25: #{linear_decoder.1} parent=15 // pred_check
          %p199 = pneg %p102
        $region26: #{linear_decoder.1} parent=15 // pred_check_branch
          %201 = sbr.rel (%p199) target = $region28
        $region27: #{linear_decoder.1} parent=15 // pred_region
          %s202 = sand.u32 %s18, 1
          %s203 = scalar_lea.sflag [#allocation6], %s202
          %s204 = sand.u32 %s92, 1
          %s205 = smul.addr %s204, 4
          %s206 = scalar_lea.vmem [#allocation7], %s205
          %s207 = smul.u32 4, %s25
          %s209 = ssub.s32 64, 64
          %210 = vsyncadd %s203, %s209
          %s211 = smul.addr %s207, 16
          %s212 = scalar_lea.hbm %s2, %s211
          %s214 = sshll.u32 %s206, 4
          %s215 = int_to_ptr.vmem [resolvable:$true] %s214
          %217 = dma.hbm_to_vmem [thread:$0]  %s212, 64, %s215, %s203
        $region28: #{linear_decoder.1} parent=15 // pred_fallthru
          _
      $region16: #{linear_decoder.1} parent=5 // pred_fallthru
        _
      %p218 = scmp.le.s32.totalorder 1, %s18
      %p219 = scmp.lt.s32.totalorder %s18, 5
      %p220 = pnand %p218, %p219
      %p221 = pneg %p220
      // Predicated region
      $region29: #{linear_decoder.1} parent=5 // pred_check
        _
      $region30: #{linear_decoder.1} parent=5 // pred_check_branch
        %223 = sbr.rel (%p220) target = $region32
      $region31: #{linear_decoder.1} parent=5 // pred_region
        %s224 = ssub.s32 %s18, 1
        %s225 = sand.u32 %s43, 1
        %s226 = scalar_lea.sflag [#allocation3], %s225
        %s227 = sand.u32 %s43, 1
        %s228 = smul.addr %s227, 512
        %s229 = scalar_lea.vmem [#allocation2], %s228
        // Predicated region
        $region33: #{linear_decoder.1} parent=31 // pred_check
          %p230 = pneg %p56
        $region34: #{linear_decoder.1} parent=31 // pred_check_branch
          %232 = sbr.rel (%p230) target = $region36
        $region35: #{linear_decoder.1} parent=31 // pred_region
          %233 = dma.done %s226, 8192
        $region36: #{linear_decoder.1} parent=31 // pred_fallthru
          _
        %s234 = sand.u32 %s23, 1
        %s235 = scalar_lea.sflag [#allocation6], %s234
        %s236 = sand.u32 %s69, 1
        %s237 = smul.addr %s236, 1024
        %s238 = scalar_lea.vmem [#allocation5], %s237
        // Predicated region
        $region37: #{linear_decoder.1} parent=31 // pred_check
          %p239 = pneg %p82
        $region38: #{linear_decoder.1} parent=31 // pred_check_branch
          %241 = sbr.rel (%p239) target = $region40
        $region39: #{linear_decoder.1} parent=31 // pred_region
          %242 = dma.done %s235, 16384
        $region40: #{linear_decoder.1} parent=31 // pred_fallthru
          _
        %s243 = sand.u32 %s23, 1
        %s244 = scalar_lea.sflag [#allocation6], %s243
        %s245 = sand.u32 %s95, 1
        %s246 = smul.addr %s245, 4
        %s247 = scalar_lea.vmem [#allocation7], %s246
        // Predicated region
        $region41: #{linear_decoder.1} parent=31 // pred_check
          %p248 = pneg %p108
        $region42: #{linear_decoder.1} parent=31 // pred_check_branch
          %250 = sbr.rel (%p248) target = $region44
        $region43: #{linear_decoder.1} parent=31 // pred_region
          %251 = dma.done %s244, 64
        $region44: #{linear_decoder.1} parent=31 // pred_fallthru
          _
        %s252 = sand.u32 %s43, 1
        %s253 = scalar_lea.sflag [#allocation3], %s252
        %s254 = sand.u32 %s43, 1
        %s255 = smul.addr %s254, 512
        %s256 = scalar_lea.vmem [#allocation2], %s255
        %p257 = pneg %p56
        %p258 = pneg %p53
        %s259 = sand.u32 %s23, 1
        %s260 = scalar_lea.sflag [#allocation6], %s259
        %s261 = sand.u32 %s69, 1
        %s262 = smul.addr %s261, 1024
        %s263 = scalar_lea.vmem [#allocation5], %s262
        %p264 = pneg %p82
        %p265 = pneg %p79
        %s266 = sand.u32 %s23, 1
        %s267 = scalar_lea.sflag [#allocation6], %s266
        %s268 = sand.u32 %s95, 1
        %s269 = smul.addr %s268, 4
        %s270 = scalar_lea.vmem [#allocation7], %s269
        %p271 = pneg %p108
        %p272 = pneg %p105
        %p273 = pneg %p136
        %p274 = pneg %p133
        %s275 = sand.u32 %s123, 1
        %s276 = scalar_lea.sflag [#allocation4], %s275
        %s277 = sand.u32 %s123, 1
        %s278 = smul.addr %s277, 1024
        %s279 = scalar_lea.vmem [#allocation8], %s278
        %s280 = smul.u32 32, %s28
        %s281 = smul.u32 64, %s27
        %s282 = smul.u32 4, %s27
        %s283 = smul.u32 32, %s28
        %s284 = smul.u32 4, %s27
        %v285 = vld [vmem:[%s229] sm:$0xff]
        %v286 = vld [vmem:[%s229 + $0x8] sm:$0xff]
        %v287 = vld [vmem:[%s229 + $0x10] sm:$0xff]
        %v288 = vld [vmem:[%s229 + $0x18] sm:$0xff]
        %v289 = vld [vmem:[%s229 + $0x20] sm:$0xff]
        %v290 = vld [vmem:[%s229 + $0x28] sm:$0xff]
        %v291 = vld [vmem:[%s229 + $0x30] sm:$0xff]
        %v292 = vld [vmem:[%s229 + $0x38] sm:$0xff]
        %v293 = vld [vmem:[%s229 + $0x40] sm:$0xff]
        %v294 = vld [vmem:[%s229 + $0x48] sm:$0xff]
        %v295 = vld [vmem:[%s229 + $0x50] sm:$0xff]
        %v296 = vld [vmem:[%s229 + $0x58] sm:$0xff]
        %v297 = vld [vmem:[%s229 + $0x60] sm:$0xff]
        %v298 = vld [vmem:[%s229 + $0x68] sm:$0xff]
        %v299 = vld [vmem:[%s229 + $0x70] sm:$0xff]
        %v300 = vld [vmem:[%s229 + $0x78] sm:$0xff]
        %v301 = vld [vmem:[%s229 + $0x80] sm:$0xff]
        %v302 = vld [vmem:[%s229 + $0x88] sm:$0xff]
        %v303 = vld [vmem:[%s229 + $0x90] sm:$0xff]
        %v304 = vld [vmem:[%s229 + $0x98] sm:$0xff]
        %v305 = vld [vmem:[%s229 + $0xa0] sm:$0xff]
        %v306 = vld [vmem:[%s229 + $0xa8] sm:$0xff]
        %v307 = vld [vmem:[%s229 + $0xb0] sm:$0xff]
        %v308 = vld [vmem:[%s229 + $0xb8] sm:$0xff]
        %v309 = vld [vmem:[%s229 + $0xc0] sm:$0xff]
        %v310 = vld [vmem:[%s229 + $0xc8] sm:$0xff]
        %v311 = vld [vmem:[%s229 + $0xd0] sm:$0xff]
        %v312 = vld [vmem:[%s229 + $0xd8] sm:$0xff]
        %v313 = vld [vmem:[%s229 + $0xe0] sm:$0xff]
        %v314 = vld [vmem:[%s229 + $0xe8] sm:$0xff]
        %v315 = vld [vmem:[%s229 + $0xf0] sm:$0xff]
        %v316 = vld [vmem:[%s229 + $0xf8] sm:$0xff]
        %v317 = vld [vmem:[%s229 + $0x100] sm:$0xff]
        %v318 = vld [vmem:[%s229 + $0x108] sm:$0xff]
        %v319 = vld [vmem:[%s229 + $0x110] sm:$0xff]
        %v320 = vld [vmem:[%s229 + $0x118] sm:$0xff]
        %v321 = vld [vmem:[%s229 + $0x120] sm:$0xff]
        %v322 = vld [vmem:[%s229 + $0x128] sm:$0xff]
        %v323 = vld [vmem:[%s229 + $0x130] sm:$0xff]
        %v324 = vld [vmem:[%s229 + $0x138] sm:$0xff]
        %v325 = vld [vmem:[%s229 + $0x140] sm:$0xff]
        %v326 = vld [vmem:[%s229 + $0x148] sm:$0xff]
        %v327 = vld [vmem:[%s229 + $0x150] sm:$0xff]
        %v328 = vld [vmem:[%s229 + $0x158] sm:$0xff]
        %v329 = vld [vmem:[%s229 + $0x160] sm:$0xff]
        %v330 = vld [vmem:[%s229 + $0x168] sm:$0xff]
        %v331 = vld [vmem:[%s229 + $0x170] sm:$0xff]
        %v332 = vld [vmem:[%s229 + $0x178] sm:$0xff]
        %v333 = vld [vmem:[%s229 + $0x180] sm:$0xff]
        %v334 = vld [vmem:[%s229 + $0x188] sm:$0xff]
        %v335 = vld [vmem:[%s229 + $0x190] sm:$0xff]
        %v336 = vld [vmem:[%s229 + $0x198] sm:$0xff]
        %v337 = vld [vmem:[%s229 + $0x1a0] sm:$0xff]
        %v338 = vld [vmem:[%s229 + $0x1a8] sm:$0xff]
        %v339 = vld [vmem:[%s229 + $0x1b0] sm:$0xff]
        %v340 = vld [vmem:[%s229 + $0x1b8] sm:$0xff]
        %v341 = vld [vmem:[%s229 + $0x1c0] sm:$0xff]
        %v342 = vld [vmem:[%s229 + $0x1c8] sm:$0xff]
        %v343 = vld [vmem:[%s229 + $0x1d0] sm:$0xff]
        %v344 = vld [vmem:[%s229 + $0x1d8] sm:$0xff]
        %v345 = vld [vmem:[%s229 + $0x1e0] sm:$0xff]
        %v346 = vld [vmem:[%s229 + $0x1e8] sm:$0xff]
        %v347 = vld [vmem:[%s229 + $0x1f0] sm:$0xff]
        %v348 = vld [vmem:[%s229 + $0x1f8] sm:$0xff]
        %v349 = vld [vmem:[%s238] sm:$0xff]
        %v350 = vld [vmem:[%s238 + $0x8] sm:$0xff]
        %v351 = vld [vmem:[%s238 + $0x10] sm:$0xff]
        %v352 = vld [vmem:[%s238 + $0x18] sm:$0xff]
        %v353 = vld [vmem:[%s238 + $0x20] sm:$0xff]
        %v354 = vld [vmem:[%s238 + $0x28] sm:$0xff]
        %v355 = vld [vmem:[%s238 + $0x30] sm:$0xff]
        %v356 = vld [vmem:[%s238 + $0x38] sm:$0xff]
        %v357 = vld [vmem:[%s238 + $0x40] sm:$0xff]
        %v358 = vld [vmem:[%s238 + $0x48] sm:$0xff]
        %v359 = vld [vmem:[%s238 + $0x50] sm:$0xff]
        %v360 = vld [vmem:[%s238 + $0x58] sm:$0xff]
        %v361 = vld [vmem:[%s238 + $0x60] sm:$0xff]
        %v362 = vld [vmem:[%s238 + $0x68] sm:$0xff]
        %v363 = vld [vmem:[%s238 + $0x70] sm:$0xff]
        %v364 = vld [vmem:[%s238 + $0x78] sm:$0xff]
        %v365 = vld [vmem:[%s238 + $0x80] sm:$0xff]
        %v366 = vld [vmem:[%s238 + $0x88] sm:$0xff]
        %v367 = vld [vmem:[%s238 + $0x90] sm:$0xff]
        %v368 = vld [vmem:[%s238 + $0x98] sm:$0xff]
        %v369 = vld [vmem:[%s238 + $0xa0] sm:$0xff]
        %v370 = vld [vmem:[%s238 + $0xa8] sm:$0xff]
        %v371 = vld [vmem:[%s238 + $0xb0] sm:$0xff]
        %v372 = vld [vmem:[%s238 + $0xb8] sm:$0xff]
        %v373 = vld [vmem:[%s238 + $0xc0] sm:$0xff]
        %v374 = vld [vmem:[%s238 + $0xc8] sm:$0xff]
        %v375 = vld [vmem:[%s238 + $0xd0] sm:$0xff]
        %v376 = vld [vmem:[%s238 + $0xd8] sm:$0xff]
        %v377 = vld [vmem:[%s238 + $0xe0] sm:$0xff]
        %v378 = vld [vmem:[%s238 + $0xe8] sm:$0xff]
        %v379 = vld [vmem:[%s238 + $0xf0] sm:$0xff]
        %v380 = vld [vmem:[%s238 + $0xf8] sm:$0xff]
        %v381 = vld [vmem:[%s238 + $0x100] sm:$0xff]
        %v382 = vld [vmem:[%s238 + $0x108] sm:$0xff]
        %v383 = vld [vmem:[%s238 + $0x110] sm:$0xff]
        %v384 = vld [vmem:[%s238 + $0x118] sm:$0xff]
        %v385 = vld [vmem:[%s238 + $0x120] sm:$0xff]
        %v386 = vld [vmem:[%s238 + $0x128] sm:$0xff]
        %v387 = vld [vmem:[%s238 + $0x130] sm:$0xff]
        %v388 = vld [vmem:[%s238 + $0x138] sm:$0xff]
        %v389 = vld [vmem:[%s238 + $0x140] sm:$0xff]
        %v390 = vld [vmem:[%s238 + $0x148] sm:$0xff]
        %v391 = vld [vmem:[%s238 + $0x150] sm:$0xff]
        %v392 = vld [vmem:[%s238 + $0x158] sm:$0xff]
        %v393 = vld [vmem:[%s238 + $0x160] sm:$0xff]
        %v394 = vld [vmem:[%s238 + $0x168] sm:$0xff]
        %v395 = vld [vmem:[%s238 + $0x170] sm:$0xff]
        %v396 = vld [vmem:[%s238 + $0x178] sm:$0xff]
        %v397 = vld [vmem:[%s238 + $0x180] sm:$0xff]
        %v398 = vld [vmem:[%s238 + $0x188] sm:$0xff]
        %v399 = vld [vmem:[%s238 + $0x190] sm:$0xff]
        %v400 = vld [vmem:[%s238 + $0x198] sm:$0xff]
        %v401 = vld [vmem:[%s238 + $0x1a0] sm:$0xff]
        %v402 = vld [vmem:[%s238 + $0x1a8] sm:$0xff]
        %v403 = vld [vmem:[%s238 + $0x1b0] sm:$0xff]
        %v404 = vld [vmem:[%s238 + $0x1b8] sm:$0xff]
        %v405 = vld [vmem:[%s238 + $0x1c0] sm:$0xff]
        %v406 = vld [vmem:[%s238 + $0x1c8] sm:$0xff]
        %v407 = vld [vmem:[%s238 + $0x1d0] sm:$0xff]
        %v408 = vld [vmem:[%s238 + $0x1d8] sm:$0xff]
        %v409 = vld [vmem:[%s238 + $0x1e0] sm:$0xff]
        %v410 = vld [vmem:[%s238 + $0x1e8] sm:$0xff]
        %v411 = vld [vmem:[%s238 + $0x1f0] sm:$0xff]
        %v412 = vld [vmem:[%s238 + $0x1f8] sm:$0xff]
        %v413 = vld [vmem:[%s238 + $0x200] sm:$0xff]
        %v414 = vld [vmem:[%s238 + $0x208] sm:$0xff]
        %v415 = vld [vmem:[%s238 + $0x210] sm:$0xff]
        %v416 = vld [vmem:[%s238 + $0x218] sm:$0xff]
        %v417 = vld [vmem:[%s238 + $0x220] sm:$0xff]
        %v418 = vld [vmem:[%s238 + $0x228] sm:$0xff]
        %v419 = vld [vmem:[%s238 + $0x230] sm:$0xff]
        %v420 = vld [vmem:[%s238 + $0x238] sm:$0xff]
        %v421 = vld [vmem:[%s238 + $0x240] sm:$0xff]
        %v422 = vld [vmem:[%s238 + $0x248] sm:$0xff]
        %v423 = vld [vmem:[%s238 + $0x250] sm:$0xff]
        %v424 = vld [vmem:[%s238 + $0x258] sm:$0xff]
        %v425 = vld [vmem:[%s238 + $0x260] sm:$0xff]
        %v426 = vld [vmem:[%s238 + $0x268] sm:$0xff]
        %v427 = vld [vmem:[%s238 + $0x270] sm:$0xff]
        %v428 = vld [vmem:[%s238 + $0x278] sm:$0xff]
        %v429 = vld [vmem:[%s238 + $0x280] sm:$0xff]
        %v430 = vld [vmem:[%s238 + $0x288] sm:$0xff]
        %v431 = vld [vmem:[%s238 + $0x290] sm:$0xff]
        %v432 = vld [vmem:[%s238 + $0x298] sm:$0xff]
        %v433 = vld [vmem:[%s238 + $0x2a0] sm:$0xff]
        %v434 = vld [vmem:[%s238 + $0x2a8] sm:$0xff]
        %v435 = vld [vmem:[%s238 + $0x2b0] sm:$0xff]
        %v436 = vld [vmem:[%s238 + $0x2b8] sm:$0xff]
        %v437 = vld [vmem:[%s238 + $0x2c0] sm:$0xff]
        %v438 = vld [vmem:[%s238 + $0x2c8] sm:$0xff]
        %v439 = vld [vmem:[%s238 + $0x2d0] sm:$0xff]
        %v440 = vld [vmem:[%s238 + $0x2d8] sm:$0xff]
        %v441 = vld [vmem:[%s238 + $0x2e0] sm:$0xff]
        %v442 = vld [vmem:[%s238 + $0x2e8] sm:$0xff]
        %v443 = vld [vmem:[%s238 + $0x2f0] sm:$0xff]
        %v444 = vld [vmem:[%s238 + $0x2f8] sm:$0xff]
        %v445 = vld [vmem:[%s238 + $0x300] sm:$0xff]
        %v446 = vld [vmem:[%s238 + $0x308] sm:$0xff]
        %v447 = vld [vmem:[%s238 + $0x310] sm:$0xff]
        %v448 = vld [vmem:[%s238 + $0x318] sm:$0xff]
        %v449 = vld [vmem:[%s238 + $0x320] sm:$0xff]
        %v450 = vld [vmem:[%s238 + $0x328] sm:$0xff]
        %v451 = vld [vmem:[%s238 + $0x330] sm:$0xff]
        %v452 = vld [vmem:[%s238 + $0x338] sm:$0xff]
        %v453 = vld [vmem:[%s238 + $0x340] sm:$0xff]
        %v454 = vld [vmem:[%s238 + $0x348] sm:$0xff]
        %v455 = vld [vmem:[%s238 + $0x350] sm:$0xff]
        %v456 = vld [vmem:[%s238 + $0x358] sm:$0xff]
        %v457 = vld [vmem:[%s238 + $0x360] sm:$0xff]
        %v458 = vld [vmem:[%s238 + $0x368] sm:$0xff]
        %v459 = vld [vmem:[%s238 + $0x370] sm:$0xff]
        %v460 = vld [vmem:[%s238 + $0x378] sm:$0xff]
        %v461 = vld [vmem:[%s238 + $0x380] sm:$0xff]
        %v462 = vld [vmem:[%s238 + $0x388] sm:$0xff]
        %v463 = vld [vmem:[%s238 + $0x390] sm:$0xff]
        %v464 = vld [vmem:[%s238 + $0x398] sm:$0xff]
        %v465 = vld [vmem:[%s238 + $0x3a0] sm:$0xff]
        %v466 = vld [vmem:[%s238 + $0x3a8] sm:$0xff]
        %v467 = vld [vmem:[%s238 + $0x3b0] sm:$0xff]
        %v468 = vld [vmem:[%s238 + $0x3b8] sm:$0xff]
        %v469 = vld [vmem:[%s238 + $0x3c0] sm:$0xff]
        %v470 = vld [vmem:[%s238 + $0x3c8] sm:$0xff]
        %v471 = vld [vmem:[%s238 + $0x3d0] sm:$0xff]
        %v472 = vld [vmem:[%s238 + $0x3d8] sm:$0xff]
        %v473 = vld [vmem:[%s238 + $0x3e0] sm:$0xff]
        %v474 = vld [vmem:[%s238 + $0x3e8] sm:$0xff]
        %v475 = vld [vmem:[%s238 + $0x3f0] sm:$0xff]
        %v476 = vld [vmem:[%s238 + $0x3f8] sm:$0xff]
        %v477 = vld [vmem:[%s247] sm:$0xf]
        %v479 = vlaneseq
        %v480 = vshrl.u32 %v479, 7
        %v481 = vsub.s32 0, %v480
        %v482 = vrot.slane %v477, %v481
        %v483 = vlaneseq
        %v484 = vshrl.u32 %v483, 7
        %v485 = vsub.s32 1, %v484
        %v486 = vrot.slane %v477, %v485
        %v487 = vlaneseq
        %v488 = vshrl.u32 %v487, 7
        %v489 = vsub.s32 2, %v488
        %v490 = vrot.slane %v477, %v489
        %v491 = vlaneseq
        %v492 = vshrl.u32 %v491, 7
        %v493 = vsub.s32 3, %v492
        %v494 = vrot.slane %v477, %v493
        %499 = vmatprep.subr.mxu0 %v350
        %500 = vmatpush1.xpose.msra.mxu0 %v349
        %501 = vmatprep.subr.mxu0 %v352
        %502 = vmatpush1.xpose.msra.mxu0 %v351
        %503 = vmatprep.subr.mxu0 %v354
        %504 = vmatpush1.xpose.msra.mxu0 %v353
        %505 = vmatprep.subr.mxu0 %v356
        %506 = vmatpush1.xpose.msra.mxu0 %v355
        %507 = vmatprep.subr.mxu0 %v358
        %508 = vmatpush1.xpose.msra.mxu0 %v357
        %509 = vmatprep.subr.mxu0 %v360
        %510 = vmatpush1.xpose.msra.mxu0 %v359
        %511 = vmatprep.subr.mxu0 %v362
        %512 = vmatpush1.xpose.msra.mxu0 %v361
        %513 = vmatprep.subr.mxu0 %v364
        %514 = vmatpush1.xpose.msra.mxu0 %v363
        %515 = vmatprep.subr.mxu0 %v366
        %516 = vmatpush1.xpose.msra.mxu0 %v365
        %517 = vmatprep.subr.mxu0 %v368
        %518 = vmatpush1.xpose.msra.mxu0 %v367
        %519 = vmatprep.subr.mxu0 %v370
        %520 = vmatpush1.xpose.msra.mxu0 %v369
        %521 = vmatprep.subr.mxu0 %v372
        %522 = vmatpush1.xpose.msra.mxu0 %v371
        %523 = vmatprep.subr.mxu0 %v374
        %524 = vmatpush1.xpose.msra.mxu0 %v373
        %525 = vmatprep.subr.mxu0 %v376
        %526 = vmatpush1.xpose.msra.mxu0 %v375
        %527 = vmatprep.subr.mxu0 %v378
        %528 = vmatpush1.xpose.msra.mxu0 %v377
        %529 = vmatprep.subr.mxu0 %v380
        %530 = vmatpush1.xpose.msra.mxu0 %v379
        %531 = vmatprep.subr.mxu0 %v382
        %532 = vmatpush1.xpose.msra.mxu0 %v381
        %533 = vmatprep.subr.mxu0 %v384
        %534 = vmatpush1.xpose.msra.mxu0 %v383
        %535 = vmatprep.subr.mxu0 %v386
        %536 = vmatpush1.xpose.msra.mxu0 %v385
        %537 = vmatprep.subr.mxu0 %v388
        %538 = vmatpush1.xpose.msra.mxu0 %v387
        %539 = vmatprep.subr.mxu0 %v390
        %540 = vmatpush1.xpose.msra.mxu0 %v389
        %541 = vmatprep.subr.mxu0 %v392
        %542 = vmatpush1.xpose.msra.mxu0 %v391
        %543 = vmatprep.subr.mxu0 %v394
        %544 = vmatpush1.xpose.msra.mxu0 %v393
        %545 = vmatprep.subr.mxu0 %v396
        %546 = vmatpush1.xpose.msra.mxu0 %v395
        %547 = vmatprep.subr.mxu0 %v398
        %548 = vmatpush1.xpose.msra.mxu0 %v397
        %549 = vmatprep.subr.mxu0 %v400
        %550 = vmatpush1.xpose.msra.mxu0 %v399
        %551 = vmatprep.subr.mxu0 %v402
        %552 = vmatpush1.xpose.msra.mxu0 %v401
        %553 = vmatprep.subr.mxu0 %v404
        %554 = vmatpush1.xpose.msra.mxu0 %v403
        %555 = vmatprep.subr.mxu0 %v406
        %556 = vmatpush1.xpose.msra.mxu0 %v405
        %557 = vmatprep.subr.mxu0 %v408
        %558 = vmatpush1.xpose.msra.mxu0 %v407
        %559 = vmatprep.subr.mxu0 %v410
        %560 = vmatpush1.xpose.msra.mxu0 %v409
        %561 = vmatprep.subr.mxu0 %v412
        %562 = vmatpush1.xpose.msra.mxu0 %v411
        %563 = vmatprep.mubr.f32.mxu0 %v286
        %564 = vmatmul.mubr.f32.gmra.mrb[0].mxu0 %v285
        %v565 = vpop.f32.mrb[0].mxu0
        %v566 = vadd.f32 %v482, %v565
        %v567 = vpop.f32.mrb[0].mxu0
        %v568 = vadd.f32 %v486, %v567
        %569 = vmatprep.mubr.f32.mxu0 %v288
        %570 = vmatmul.mubr.f32.gmra.mrb[0].mxu0 %v287
        %v571 = vpop.f32.mrb[0].mxu0
        %v572 = vadd.f32 %v482, %v571
        %v573 = vpop.f32.mrb[0].mxu0
        %v574 = vadd.f32 %v486, %v573
        %575 = vmatprep.mubr.f32.mxu0 %v290
        %576 = vmatmul.mubr.f32.gmra.mrb[0].mxu0 %v289
        %v577 = vpop.f32.mrb[0].mxu0
        %v578 = vadd.f32 %v482, %v577
        %v579 = vpop.f32.mrb[0].mxu0
        %v580 = vadd.f32 %v486, %v579
        %581 = vmatprep.mubr.f32.mxu0 %v292
        %582 = vmatmul.mubr.f32.gmra.mrb[0].mxu0 %v291
        %v583 = vpop.f32.mrb[0].mxu0
        %v584 = vadd.f32 %v482, %v583
        %v585 = vpop.f32.mrb[0].mxu0
        %v586 = vadd.f32 %v486, %v585
        %587 = vmatprep.mubr.f32.mxu0 %v294
        %588 = vmatmul.mubr.f32.gmra.mrb[0].mxu0 %v293
        %v589 = vpop.f32.mrb[0].mxu0
        %v590 = vadd.f32 %v482, %v589
        %v591 = vpop.f32.mrb[0].mxu0
        %v592 = vadd.f32 %v486, %v591
        %593 = vmatprep.mubr.f32.mxu0 %v296
        %594 = vmatmul.mubr.f32.gmra.mrb[0].mxu0 %v295
        %v595 = vpop.f32.mrb[0].mxu0
        %v596 = vadd.f32 %v482, %v595
        %v597 = vpop.f32.mrb[0].mxu0
        %v598 = vadd.f32 %v486, %v597
        %599 = vmatprep.mubr.f32.mxu0 %v298
        %600 = vmatmul.mubr.f32.gmra.mrb[0].mxu0 %v297
        %v601 = vpop.f32.mrb[0].mxu0
        %v602 = vadd.f32 %v482, %v601
        %v603 = vpop.f32.mrb[0].mxu0
        %v604 = vadd.f32 %v486, %v603
        %605 = vmatprep.mubr.f32.mxu0 %v300
        %606 = vmatmul.mubr.f32.gmra.mrb[0].mxu0 %v299
        %v607 = vpop.f32.mrb[0].mxu0
        %v608 = vadd.f32 %v482, %v607
        %v609 = vpop.f32.mrb[0].mxu0
        %v610 = vadd.f32 %v486, %v609
        %611 = vmatprep.mubr.f32.mxu0 %v302
        %612 = vmatmul.mubr.f32.gmra.mrb[0].mxu0 %v301
        %v613 = vpop.f32.mrb[0].mxu0
        %v614 = vadd.f32 %v482, %v613
        %v615 = vpop.f32.mrb[0].mxu0
        %v616 = vadd.f32 %v486, %v615
        %617 = vmatprep.mubr.f32.mxu0 %v304
        %618 = vmatmul.mubr.f32.gmra.mrb[0].mxu0 %v303
        %v619 = vpop.f32.mrb[0].mxu0
        %v620 = vadd.f32 %v482, %v619
        %v621 = vpop.f32.mrb[0].mxu0
        %v622 = vadd.f32 %v486, %v621
        %623 = vmatprep.mubr.f32.mxu0 %v306
        %624 = vmatmul.mubr.f32.gmra.mrb[0].mxu0 %v305
        %v625 = vpop.f32.mrb[0].mxu0
        %v626 = vadd.f32 %v482, %v625
        %v627 = vpop.f32.mrb[0].mxu0
        %v628 = vadd.f32 %v486, %v627
        %629 = vmatprep.mubr.f32.mxu0 %v308
        %630 = vmatmul.mubr.f32.gmra.mrb[0].mxu0 %v307
        %v631 = vpop.f32.mrb[0].mxu0
        %v632 = vadd.f32 %v482, %v631
        %v633 = vpop.f32.mrb[0].mxu0
        %v634 = vadd.f32 %v486, %v633
        %635 = vmatprep.mubr.f32.mxu0 %v310
        %636 = vmatmul.mubr.f32.gmra.mrb[0].mxu0 %v309
        %v637 = vpop.f32.mrb[0].mxu0
        %v638 = vadd.f32 %v482, %v637
        %v639 = vpop.f32.mrb[0].mxu0
        %v640 = vadd.f32 %v486, %v639
        %641 = vmatprep.mubr.f32.mxu0 %v312
        %642 = vmatmul.mubr.f32.gmra.mrb[0].mxu0 %v311
        %v643 = vpop.f32.mrb[0].mxu0
        %v644 = vadd.f32 %v482, %v643
        %v645 = vpop.f32.mrb[0].mxu0
        %v646 = vadd.f32 %v486, %v645
        %647 = vmatprep.mubr.f32.mxu0 %v314
        %648 = vmatmul.mubr.f32.gmra.mrb[0].mxu0 %v313
        %v649 = vpop.f32.mrb[0].mxu0
        %v650 = vadd.f32 %v482, %v649
        %v651 = vpop.f32.mrb[0].mxu0
        %v652 = vadd.f32 %v486, %v651
        %653 = vmatprep.mubr.f32.mxu0 %v316
        %654 = vmatmul.mubr.f32.gmra.mrb[0].mxu0 %v315
        %v655 = vpop.f32.mrb[0].mxu0
        %v656 = vadd.f32 %v482, %v655
        %v657 = vpop.f32.mrb[0].mxu0
        %v658 = vadd.f32 %v486, %v657
        %659 = vmatprep.mubr.f32.mxu0 %v318
        %660 = vmatmul.mubr.f32.gmra.mrb[0].mxu0 %v317
        %v661 = vpop.f32.mrb[0].mxu0
        %v662 = vadd.f32 %v482, %v661
        %v663 = vpop.f32.mrb[0].mxu0
        %v664 = vadd.f32 %v486, %v663
        %665 = vmatprep.mubr.f32.mxu0 %v320
        %666 = vmatmul.mubr.f32.gmra.mrb[0].mxu0 %v319
        %v667 = vpop.f32.mrb[0].mxu0
        %v668 = vadd.f32 %v482, %v667
        %v669 = vpop.f32.mrb[0].mxu0
        %v670 = vadd.f32 %v486, %v669
        %671 = vmatprep.mubr.f32.mxu0 %v322
        %672 = vmatmul.mubr.f32.gmra.mrb[0].mxu0 %v321
        %v673 = vpop.f32.mrb[0].mxu0
        %v674 = vadd.f32 %v482, %v673
        %v675 = vpop.f32.mrb[0].mxu0
        %v676 = vadd.f32 %v486, %v675
        %677 = vmatprep.mubr.f32.mxu0 %v324
        %678 = vmatmul.mubr.f32.gmra.mrb[0].mxu0 %v323
        %v679 = vpop.f32.mrb[0].mxu0
        %v680 = vadd.f32 %v482, %v679
        %v681 = vpop.f32.mrb[0].mxu0
        %v682 = vadd.f32 %v486, %v681
        %683 = vmatprep.mubr.f32.mxu0 %v326
        %684 = vmatmul.mubr.f32.gmra.mrb[0].mxu0 %v325
        %v685 = vpop.f32.mrb[0].mxu0
        %v686 = vadd.f32 %v482, %v685
        %v687 = vpop.f32.mrb[0].mxu0
        %v688 = vadd.f32 %v486, %v687
        %689 = vmatprep.mubr.f32.mxu0 %v328
        %690 = vmatmul.mubr.f32.gmra.mrb[0].mxu0 %v327
        %v691 = vpop.f32.mrb[0].mxu0
        %v692 = vadd.f32 %v482, %v691
        %v693 = vpop.f32.mrb[0].mxu0
        %v694 = vadd.f32 %v486, %v693
        %695 = vmatprep.mubr.f32.mxu0 %v330
        %696 = vmatmul.mubr.f32.gmra.mrb[0].mxu0 %v329
        %v697 = vpop.f32.mrb[0].mxu0
        %v698 = vadd.f32 %v482, %v697
        %v699 = vpop.f32.mrb[0].mxu0
        %v700 = vadd.f32 %v486, %v699
        %701 = vmatprep.mubr.f32.mxu0 %v332
        %702 = vmatmul.mubr.f32.gmra.mrb[0].mxu0 %v331
        %v703 = vpop.f32.mrb[0].mxu0
        %v704 = vadd.f32 %v482, %v703
        %v705 = vpop.f32.mrb[0].mxu0
        %v706 = vadd.f32 %v486, %v705
        %707 = vmatprep.mubr.f32.mxu0 %v334
        %708 = vmatmul.mubr.f32.gmra.mrb[0].mxu0 %v333
        %v709 = vpop.f32.mrb[0].mxu0
        %v710 = vadd.f32 %v482, %v709
        %v711 = vpop.f32.mrb[0].mxu0
        %v712 = vadd.f32 %v486, %v711
        %713 = vmatprep.mubr.f32.mxu0 %v336
        %714 = vmatmul.mubr.f32.gmra.mrb[0].mxu0 %v335
        %v715 = vpop.f32.mrb[0].mxu0
        %v716 = vadd.f32 %v482, %v715
        %v717 = vpop.f32.mrb[0].mxu0
        %v718 = vadd.f32 %v486, %v717
        %719 = vmatprep.mubr.f32.mxu0 %v338
        %720 = vmatmul.mubr.f32.gmra.mrb[0].mxu0 %v337
        %v721 = vpop.f32.mrb[0].mxu0
        %v722 = vadd.f32 %v482, %v721
        %v723 = vpop.f32.mrb[0].mxu0
        %v724 = vadd.f32 %v486, %v723
        %725 = vmatprep.mubr.f32.mxu0 %v340
        %726 = vmatmul.mubr.f32.gmra.mrb[0].mxu0 %v339
        %v727 = vpop.f32.mrb[0].mxu0
        %v728 = vadd.f32 %v482, %v727
        %v729 = vpop.f32.mrb[0].mxu0
        %v730 = vadd.f32 %v486, %v729
        %731 = vmatprep.mubr.f32.mxu0 %v342
        %732 = vmatmul.mubr.f32.gmra.mrb[0].mxu0 %v341
        %v733 = vpop.f32.mrb[0].mxu0
        %v734 = vadd.f32 %v482, %v733
        %v735 = vpop.f32.mrb[0].mxu0
        %v736 = vadd.f32 %v486, %v735
        %737 = vmatprep.mubr.f32.mxu0 %v344
        %738 = vmatmul.mubr.f32.gmra.mrb[0].mxu0 %v343
        %v739 = vpop.f32.mrb[0].mxu0
        %v740 = vadd.f32 %v482, %v739
        %v741 = vpop.f32.mrb[0].mxu0
        %v742 = vadd.f32 %v486, %v741
        %743 = vmatprep.mubr.f32.mxu0 %v346
        %744 = vmatmul.mubr.f32.gmra.mrb[0].mxu0 %v345
        %v745 = vpop.f32.mrb[0].mxu0
        %v746 = vadd.f32 %v482, %v745
        %v747 = vpop.f32.mrb[0].mxu0
        %v748 = vadd.f32 %v486, %v747
        %749 = vmatprep.mubr.f32.mxu0 %v348
        %750 = vmatmul.mubr.f32.gmra.mrb[0].mxu0 %v347
        %v751 = vpop.f32.mrb[0].mxu0
        %v752 = vadd.f32 %v482, %v751
        %v753 = vpop.f32.mrb[0].mxu0
        %v754 = vadd.f32 %v486, %v753
        %755 = vdwg.mxu0
        %756 = vmatprep.subr.mxu0 %v414
        %757 = vmatpush1.xpose.msra.mxu0 %v413
        %758 = vmatprep.subr.mxu0 %v416
        %759 = vmatpush1.xpose.msra.mxu0 %v415
        %760 = vmatprep.subr.mxu0 %v418
        %761 = vmatpush1.xpose.msra.mxu0 %v417
        %762 = vmatprep.subr.mxu0 %v420
        %763 = vmatpush1.xpose.msra.mxu0 %v419
        %764 = vmatprep.subr.mxu0 %v422
        %765 = vmatpush1.xpose.msra.mxu0 %v421
        %766 = vmatprep.subr.mxu0 %v424
        %767 = vmatpush1.xpose.msra.mxu0 %v423
        %768 = vmatprep.subr.mxu0 %v426
        %769 = vmatpush1.xpose.msra.mxu0 %v425
        %770 = vmatprep.subr.mxu0 %v428
        %771 = vmatpush1.xpose.msra.mxu0 %v427
        %772 = vmatprep.subr.mxu0 %v430
        %773 = vmatpush1.xpose.msra.mxu0 %v429
        %774 = vmatprep.subr.mxu0 %v432
        %775 = vmatpush1.xpose.msra.mxu0 %v431
        %776 = vmatprep.subr.mxu0 %v434
        %777 = vmatpush1.xpose.msra.mxu0 %v433
        %778 = vmatprep.subr.mxu0 %v436
        %779 = vmatpush1.xpose.msra.mxu0 %v435
        %780 = vmatprep.subr.mxu0 %v438
        %781 = vmatpush1.xpose.msra.mxu0 %v437
        %782 = vmatprep.subr.mxu0 %v440
        %783 = vmatpush1.xpose.msra.mxu0 %v439
        %784 = vmatprep.subr.mxu0 %v442
        %785 = vmatpush1.xpose.msra.mxu0 %v441
        %786 = vmatprep.subr.mxu0 %v444
        %787 = vmatpush1.xpose.msra.mxu0 %v443
        %788 = vmatprep.subr.mxu0 %v446
        %789 = vmatpush1.xpose.msra.mxu0 %v445
        %790 = vmatprep.subr.mxu0 %v448
        %791 = vmatpush1.xpose.msra.mxu0 %v447
        %792 = vmatprep.subr.mxu0 %v450
        %793 = vmatpush1.xpose.msra.mxu0 %v449
        %794 = vmatprep.subr.mxu0 %v452
        %795 = vmatpush1.xpose.msra.mxu0 %v451
        %796 = vmatprep.subr.mxu0 %v454
        %797 = vmatpush1.xpose.msra.mxu0 %v453
        %798 = vmatprep.subr.mxu0 %v456
        %799 = vmatpush1.xpose.msra.mxu0 %v455
        %800 = vmatprep.subr.mxu0 %v458
        %801 = vmatpush1.xpose.msra.mxu0 %v457
        %802 = vmatprep.subr.mxu0 %v460
        %803 = vmatpush1.xpose.msra.mxu0 %v459
        %804 = vmatprep.subr.mxu0 %v462
        %805 = vmatpush1.xpose.msra.mxu0 %v461
        %806 = vmatprep.subr.mxu0 %v464
        %807 = vmatpush1.xpose.msra.mxu0 %v463
        %808 = vmatprep.subr.mxu0 %v466
        %809 = vmatpush1.xpose.msra.mxu0 %v465
        %810 = vmatprep.subr.mxu0 %v468
        %811 = vmatpush1.xpose.msra.mxu0 %v467
        %812 = vmatprep.subr.mxu0 %v470
        %813 = vmatpush1.xpose.msra.mxu0 %v469
        %814 = vmatprep.subr.mxu0 %v472
        %815 = vmatpush1.xpose.msra.mxu0 %v471
        %816 = vmatprep.subr.mxu0 %v474
        %817 = vmatpush1.xpose.msra.mxu0 %v473
        %818 = vmatprep.subr.mxu0 %v476
        %819 = vmatpush1.xpose.msra.mxu0 %v475
        %820 = vmatprep.mubr.f32.mxu0 %v286
        %821 = vmatmul.mubr.f32.gmra.mrb[0].mxu0 %v285
        %v822 = vpop.f32.mrb[0].mxu0
        %v823 = vadd.f32 %v490, %v822
        %v824 = vpop.f32.mrb[0].mxu0
        %v825 = vadd.f32 %v494, %v824
        %826 = vmatprep.mubr.f32.mxu0 %v288
        %827 = vmatmul.mubr.f32.gmra.mrb[0].mxu0 %v287
        %v828 = vpop.f32.mrb[0].mxu0
        %v829 = vadd.f32 %v490, %v828
        %v830 = vpop.f32.mrb[0].mxu0
        %v831 = vadd.f32 %v494, %v830
        %832 = vmatprep.mubr.f32.mxu0 %v290
        %833 = vmatmul.mubr.f32.gmra.mrb[0].mxu0 %v289
        %v834 = vpop.f32.mrb[0].mxu0
        %v835 = vadd.f32 %v490, %v834
        %v836 = vpop.f32.mrb[0].mxu0
        %v837 = vadd.f32 %v494, %v836
        %838 = vmatprep.mubr.f32.mxu0 %v292
        %839 = vmatmul.mubr.f32.gmra.mrb[0].mxu0 %v291
        %v840 = vpop.f32.mrb[0].mxu0
        %v841 = vadd.f32 %v490, %v840
        %v842 = vpop.f32.mrb[0].mxu0
        %v843 = vadd.f32 %v494, %v842
        %844 = vmatprep.mubr.f32.mxu0 %v294
        %845 = vmatmul.mubr.f32.gmra.mrb[0].mxu0 %v293
        %v846 = vpop.f32.mrb[0].mxu0
        %v847 = vadd.f32 %v490, %v846
        %v848 = vpop.f32.mrb[0].mxu0
        %v849 = vadd.f32 %v494, %v848
        %850 = vmatprep.mubr.f32.mxu0 %v296
        %851 = vmatmul.mubr.f32.gmra.mrb[0].mxu0 %v295
        %v852 = vpop.f32.mrb[0].mxu0
        %v853 = vadd.f32 %v490, %v852
        %v854 = vpop.f32.mrb[0].mxu0
        %v855 = vadd.f32 %v494, %v854
        %856 = vmatprep.mubr.f32.mxu0 %v298
        %857 = vmatmul.mubr.f32.gmra.mrb[0].mxu0 %v297
        %v858 = vpop.f32.mrb[0].mxu0
        %v859 = vadd.f32 %v490, %v858
        %v860 = vpop.f32.mrb[0].mxu0
        %v861 = vadd.f32 %v494, %v860
        %862 = vmatprep.mubr.f32.mxu0 %v300
        %863 = vmatmul.mubr.f32.gmra.mrb[0].mxu0 %v299
        %v864 = vpop.f32.mrb[0].mxu0
        %v865 = vadd.f32 %v490, %v864
        %v866 = vpop.f32.mrb[0].mxu0
        %v867 = vadd.f32 %v494, %v866
        %868 = vmatprep.mubr.f32.mxu0 %v302
        %869 = vmatmul.mubr.f32.gmra.mrb[0].mxu0 %v301
        %v870 = vpop.f32.mrb[0].mxu0
        %v871 = vadd.f32 %v490, %v870
        %v872 = vpop.f32.mrb[0].mxu0
        %v873 = vadd.f32 %v494, %v872
        %874 = vmatprep.mubr.f32.mxu0 %v304
        %875 = vmatmul.mubr.f32.gmra.mrb[0].mxu0 %v303
        %v876 = vpop.f32.mrb[0].mxu0
        %v877 = vadd.f32 %v490, %v876
        %v878 = vpop.f32.mrb[0].mxu0
        %v879 = vadd.f32 %v494, %v878
        %880 = vmatprep.mubr.f32.mxu0 %v306
        %881 = vmatmul.mubr.f32.gmra.mrb[0].mxu0 %v305
        %v882 = vpop.f32.mrb[0].mxu0
        %v883 = vadd.f32 %v490, %v882
        %v884 = vpop.f32.mrb[0].mxu0
        %v885 = vadd.f32 %v494, %v884
        %886 = vmatprep.mubr.f32.mxu0 %v308
        %887 = vmatmul.mubr.f32.gmra.mrb[0].mxu0 %v307
        %v888 = vpop.f32.mrb[0].mxu0
        %v889 = vadd.f32 %v490, %v888
        %v890 = vpop.f32.mrb[0].mxu0
        %v891 = vadd.f32 %v494, %v890
        %892 = vmatprep.mubr.f32.mxu0 %v310
        %893 = vmatmul.mubr.f32.gmra.mrb[0].mxu0 %v309
        %v894 = vpop.f32.mrb[0].mxu0
        %v895 = vadd.f32 %v490, %v894
        %v896 = vpop.f32.mrb[0].mxu0
        %v897 = vadd.f32 %v494, %v896
        %898 = vmatprep.mubr.f32.mxu0 %v312
        %899 = vmatmul.mubr.f32.gmra.mrb[0].mxu0 %v311
        %v900 = vpop.f32.mrb[0].mxu0
        %v901 = vadd.f32 %v490, %v900
        %v902 = vpop.f32.mrb[0].mxu0
        %v903 = vadd.f32 %v494, %v902
        %904 = vmatprep.mubr.f32.mxu0 %v314
        %905 = vmatmul.mubr.f32.gmra.mrb[0].mxu0 %v313
        %v906 = vpop.f32.mrb[0].mxu0
        %v907 = vadd.f32 %v490, %v906
        %v908 = vpop.f32.mrb[0].mxu0
        %v909 = vadd.f32 %v494, %v908
        %910 = vmatprep.mubr.f32.mxu0 %v316
        %911 = vmatmul.mubr.f32.gmra.mrb[0].mxu0 %v315
        %v912 = vpop.f32.mrb[0].mxu0
        %v913 = vadd.f32 %v490, %v912
        %v914 = vpop.f32.mrb[0].mxu0
        %v915 = vadd.f32 %v494, %v914
        %916 = vmatprep.mubr.f32.mxu0 %v318
        %917 = vmatmul.mubr.f32.gmra.mrb[0].mxu0 %v317
        %v918 = vpop.f32.mrb[0].mxu0
        %v919 = vadd.f32 %v490, %v918
        %v920 = vpop.f32.mrb[0].mxu0
        %v921 = vadd.f32 %v494, %v920
        %922 = vmatprep.mubr.f32.mxu0 %v320
        %923 = vmatmul.mubr.f32.gmra.mrb[0].mxu0 %v319
        %v924 = vpop.f32.mrb[0].mxu0
        %v925 = vadd.f32 %v490, %v924
        %v926 = vpop.f32.mrb[0].mxu0
        %v927 = vadd.f32 %v494, %v926
        %928 = vmatprep.mubr.f32.mxu0 %v322
        %929 = vmatmul.mubr.f32.gmra.mrb[0].mxu0 %v321
        %v930 = vpop.f32.mrb[0].mxu0
        %v931 = vadd.f32 %v490, %v930
        %v932 = vpop.f32.mrb[0].mxu0
        %v933 = vadd.f32 %v494, %v932
        %934 = vmatprep.mubr.f32.mxu0 %v324
        %935 = vmatmul.mubr.f32.gmra.mrb[0].mxu0 %v323
        %v936 = vpop.f32.mrb[0].mxu0
        %v937 = vadd.f32 %v490, %v936
        %v938 = vpop.f32.mrb[0].mxu0
        %v939 = vadd.f32 %v494, %v938
        %940 = vmatprep.mubr.f32.mxu0 %v326
        %941 = vmatmul.mubr.f32.gmra.mrb[0].mxu0 %v325
        %v942 = vpop.f32.mrb[0].mxu0
        %v943 = vadd.f32 %v490, %v942
        %v944 = vpop.f32.mrb[0].mxu0
        %v945 = vadd.f32 %v494, %v944
        %946 = vmatprep.mubr.f32.mxu0 %v328
        %947 = vmatmul.mubr.f32.gmra.mrb[0].mxu0 %v327
        %v948 = vpop.f32.mrb[0].mxu0
        %v949 = vadd.f32 %v490, %v948
        %v950 = vpop.f32.mrb[0].mxu0
        %v951 = vadd.f32 %v494, %v950
        %952 = vmatprep.mubr.f32.mxu0 %v330
        %953 = vmatmul.mubr.f32.gmra.mrb[0].mxu0 %v329
        %v954 = vpop.f32.mrb[0].mxu0
        %v955 = vadd.f32 %v490, %v954
        %v956 = vpop.f32.mrb[0].mxu0
        %v957 = vadd.f32 %v494, %v956
        %958 = vmatprep.mubr.f32.mxu0 %v332
        %959 = vmatmul.mubr.f32.gmra.mrb[0].mxu0 %v331
        %v960 = vpop.f32.mrb[0].mxu0
        %v961 = vadd.f32 %v490, %v960
        %v962 = vpop.f32.mrb[0].mxu0
        %v963 = vadd.f32 %v494, %v962
        %964 = vmatprep.mubr.f32.mxu0 %v334
        %965 = vmatmul.mubr.f32.gmra.mrb[0].mxu0 %v333
        %v966 = vpop.f32.mrb[0].mxu0
        %v967 = vadd.f32 %v490, %v966
        %v968 = vpop.f32.mrb[0].mxu0
        %v969 = vadd.f32 %v494, %v968
        %970 = vmatprep.mubr.f32.mxu0 %v336
        %971 = vmatmul.mubr.f32.gmra.mrb[0].mxu0 %v335
        %v972 = vpop.f32.mrb[0].mxu0
        %v973 = vadd.f32 %v490, %v972
        %v974 = vpop.f32.mrb[0].mxu0
        %v975 = vadd.f32 %v494, %v974
        %976 = vmatprep.mubr.f32.mxu0 %v338
        %977 = vmatmul.mubr.f32.gmra.mrb[0].mxu0 %v337
        %v978 = vpop.f32.mrb[0].mxu0
        %v979 = vadd.f32 %v490, %v978
        %v980 = vpop.f32.mrb[0].mxu0
        %v981 = vadd.f32 %v494, %v980
        %982 = vmatprep.mubr.f32.mxu0 %v340
        %983 = vmatmul.mubr.f32.gmra.mrb[0].mxu0 %v339
        %v984 = vpop.f32.mrb[0].mxu0
        %v985 = vadd.f32 %v490, %v984
        %v986 = vpop.f32.mrb[0].mxu0
        %v987 = vadd.f32 %v494, %v986
        %988 = vmatprep.mubr.f32.mxu0 %v342
        %989 = vmatmul.mubr.f32.gmra.mrb[0].mxu0 %v341
        %v990 = vpop.f32.mrb[0].mxu0
        %v991 = vadd.f32 %v490, %v990
        %v992 = vpop.f32.mrb[0].mxu0
        %v993 = vadd.f32 %v494, %v992
        %994 = vmatprep.mubr.f32.mxu0 %v344
        %995 = vmatmul.mubr.f32.gmra.mrb[0].mxu0 %v343
        %v996 = vpop.f32.mrb[0].mxu0
        %v997 = vadd.f32 %v490, %v996
        %v998 = vpop.f32.mrb[0].mxu0
        %v999 = vadd.f32 %v494, %v998
        %1000 = vmatprep.mubr.f32.mxu0 %v346
        %1001 = vmatmul.mubr.f32.gmra.mrb[0].mxu0 %v345
        %v1002 = vpop.f32.mrb[0].mxu0
        %v1003 = vadd.f32 %v490, %v1002
        %v1004 = vpop.f32.mrb[0].mxu0
        %v1005 = vadd.f32 %v494, %v1004
        %1006 = vmatprep.mubr.f32.mxu0 %v348
        %1007 = vmatmul.mubr.f32.gmra.mrb[0].mxu0 %v347
        %v1008 = vpop.f32.mrb[0].mxu0
        %v1009 = vadd.f32 %v490, %v1008
        %v1010 = vpop.f32.mrb[0].mxu0
        %v1011 = vadd.f32 %v494, %v1010
        %1012 = vdwg.mxu0
        %1013 = vst [vmem:[%s279] sm:$0xff] %v566
        %1014 = vst [vmem:[%s279 + $0x8] sm:$0xff] %v568
        %1015 = vst [vmem:[%s279 + $0x10] sm:$0xff] %v823
        %1016 = vst [vmem:[%s279 + $0x18] sm:$0xff] %v825
        %1017 = vst [vmem:[%s279 + $0x20] sm:$0xff] %v572
        %1018 = vst [vmem:[%s279 + $0x28] sm:$0xff] %v574
        %1019 = vst [vmem:[%s279 + $0x30] sm:$0xff] %v829
        %1020 = vst [vmem:[%s279 + $0x38] sm:$0xff] %v831
        %1021 = vst [vmem:[%s279 + $0x40] sm:$0xff] %v578
        %1022 = vst [vmem:[%s279 + $0x48] sm:$0xff] %v580
        %1023 = vst [vmem:[%s279 + $0x50] sm:$0xff] %v835
        %1024 = vst [vmem:[%s279 + $0x58] sm:$0xff] %v837
        %1025 = vst [vmem:[%s279 + $0x60] sm:$0xff] %v584
        %1026 = vst [vmem:[%s279 + $0x68] sm:$0xff] %v586
        %1027 = vst [vmem:[%s279 + $0x70] sm:$0xff] %v841
        %1028 = vst [vmem:[%s279 + $0x78] sm:$0xff] %v843
        %1029 = vst [vmem:[%s279 + $0x80] sm:$0xff] %v590
        %1030 = vst [vmem:[%s279 + $0x88] sm:$0xff] %v592
        %1031 = vst [vmem:[%s279 + $0x90] sm:$0xff] %v847
        %1032 = vst [vmem:[%s279 + $0x98] sm:$0xff] %v849
        %1033 = vst [vmem:[%s279 + $0xa0] sm:$0xff] %v596
        %1034 = vst [vmem:[%s279 + $0xa8] sm:$0xff] %v598
        %1035 = vst [vmem:[%s279 + $0xb0] sm:$0xff] %v853
        %1036 = vst [vmem:[%s279 + $0xb8] sm:$0xff] %v855
        %1037 = vst [vmem:[%s279 + $0xc0] sm:$0xff] %v602
        %1038 = vst [vmem:[%s279 + $0xc8] sm:$0xff] %v604
        %1039 = vst [vmem:[%s279 + $0xd0] sm:$0xff] %v859
        %1040 = vst [vmem:[%s279 + $0xd8] sm:$0xff] %v861
        %1041 = vst [vmem:[%s279 + $0xe0] sm:$0xff] %v608
        %1042 = vst [vmem:[%s279 + $0xe8] sm:$0xff] %v610
        %1043 = vst [vmem:[%s279 + $0xf0] sm:$0xff] %v865
        %1044 = vst [vmem:[%s279 + $0xf8] sm:$0xff] %v867
        %1045 = vst [vmem:[%s279 + $0x100] sm:$0xff] %v614
        %1046 = vst [vmem:[%s279 + $0x108] sm:$0xff] %v616
        %1047 = vst [vmem:[%s279 + $0x110] sm:$0xff] %v871
        %1048 = vst [vmem:[%s279 + $0x118] sm:$0xff] %v873
        %1049 = vst [vmem:[%s279 + $0x120] sm:$0xff] %v620
        %1050 = vst [vmem:[%s279 + $0x128] sm:$0xff] %v622
        %1051 = vst [vmem:[%s279 + $0x130] sm:$0xff] %v877
        %1052 = vst [vmem:[%s279 + $0x138] sm:$0xff] %v879
        %1053 = vst [vmem:[%s279 + $0x140] sm:$0xff] %v626
        %1054 = vst [vmem:[%s279 + $0x148] sm:$0xff] %v628
        %1055 = vst [vmem:[%s279 + $0x150] sm:$0xff] %v883
        %1056 = vst [vmem:[%s279 + $0x158] sm:$0xff] %v885
        %1057 = vst [vmem:[%s279 + $0x160] sm:$0xff] %v632
        %1058 = vst [vmem:[%s279 + $0x168] sm:$0xff] %v634
        %1059 = vst [vmem:[%s279 + $0x170] sm:$0xff] %v889
        %1060 = vst [vmem:[%s279 + $0x178] sm:$0xff] %v891
        %1061 = vst [vmem:[%s279 + $0x180] sm:$0xff] %v638
        %1062 = vst [vmem:[%s279 + $0x188] sm:$0xff] %v640
        %1063 = vst [vmem:[%s279 + $0x190] sm:$0xff] %v895
        %1064 = vst [vmem:[%s279 + $0x198] sm:$0xff] %v897
        %1065 = vst [vmem:[%s279 + $0x1a0] sm:$0xff] %v644
        %1066 = vst [vmem:[%s279 + $0x1a8] sm:$0xff] %v646
        %1067 = vst [vmem:[%s279 + $0x1b0] sm:$0xff] %v901
        %1068 = vst [vmem:[%s279 + $0x1b8] sm:$0xff] %v903
        %1069 = vst [vmem:[%s279 + $0x1c0] sm:$0xff] %v650
        %1070 = vst [vmem:[%s279 + $0x1c8] sm:$0xff] %v652
        %1071 = vst [vmem:[%s279 + $0x1d0] sm:$0xff] %v907
        %1072 = vst [vmem:[%s279 + $0x1d8] sm:$0xff] %v909
        %1073 = vst [vmem:[%s279 + $0x1e0] sm:$0xff] %v656
        %1074 = vst [vmem:[%s279 + $0x1e8] sm:$0xff] %v658
        %1075 = vst [vmem:[%s279 + $0x1f0] sm:$0xff] %v913
        %1076 = vst [vmem:[%s279 + $0x1f8] sm:$0xff] %v915
        %1077 = vst [vmem:[%s279 + $0x200] sm:$0xff] %v662
        %1078 = vst [vmem:[%s279 + $0x208] sm:$0xff] %v664
        %1079 = vst [vmem:[%s279 + $0x210] sm:$0xff] %v919
        %1080 = vst [vmem:[%s279 + $0x218] sm:$0xff] %v921
        %1081 = vst [vmem:[%s279 + $0x220] sm:$0xff] %v668
        %1082 = vst [vmem:[%s279 + $0x228] sm:$0xff] %v670
        %1083 = vst [vmem:[%s279 + $0x230] sm:$0xff] %v925
        %1084 = vst [vmem:[%s279 + $0x238] sm:$0xff] %v927
        %1085 = vst [vmem:[%s279 + $0x240] sm:$0xff] %v674
        %1086 = vst [vmem:[%s279 + $0x248] sm:$0xff] %v676
        %1087 = vst [vmem:[%s279 + $0x250] sm:$0xff] %v931
        %1088 = vst [vmem:[%s279 + $0x258] sm:$0xff] %v933
        %1089 = vst [vmem:[%s279 + $0x260] sm:$0xff] %v680
        %1090 = vst [vmem:[%s279 + $0x268] sm:$0xff] %v682
        %1091 = vst [vmem:[%s279 + $0x270] sm:$0xff] %v937
        %1092 = vst [vmem:[%s279 + $0x278] sm:$0xff] %v939
        %1093 = vst [vmem:[%s279 + $0x280] sm:$0xff] %v686
        %1094 = vst [vmem:[%s279 + $0x288] sm:$0xff] %v688
        %1095 = vst [vmem:[%s279 + $0x290] sm:$0xff] %v943
        %1096 = vst [vmem:[%s279 + $0x298] sm:$0xff] %v945
        %1097 = vst [vmem:[%s279 + $0x2a0] sm:$0xff] %v692
        %1098 = vst [vmem:[%s279 + $0x2a8] sm:$0xff] %v694
        %1099 = vst [vmem:[%s279 + $0x2b0] sm:$0xff] %v949
        %1100 = vst [vmem:[%s279 + $0x2b8] sm:$0xff] %v951
        %1101 = vst [vmem:[%s279 + $0x2c0] sm:$0xff] %v698
        %1102 = vst [vmem:[%s279 + $0x2c8] sm:$0xff] %v700
        %1103 = vst [vmem:[%s279 + $0x2d0] sm:$0xff] %v955
        %1104 = vst [vmem:[%s279 + $0x2d8] sm:$0xff] %v957
        %1105 = vst [vmem:[%s279 + $0x2e0] sm:$0xff] %v704
        %1106 = vst [vmem:[%s279 + $0x2e8] sm:$0xff] %v706
        %1107 = vst [vmem:[%s279 + $0x2f0] sm:$0xff] %v961
        %1108 = vst [vmem:[%s279 + $0x2f8] sm:$0xff] %v963
        %1109 = vst [vmem:[%s279 + $0x300] sm:$0xff] %v710
        %1110 = vst [vmem:[%s279 + $0x308] sm:$0xff] %v712
        %1111 = vst [vmem:[%s279 + $0x310] sm:$0xff] %v967
        %1112 = vst [vmem:[%s279 + $0x318] sm:$0xff] %v969
        %1113 = vst [vmem:[%s279 + $0x320] sm:$0xff] %v716
        %1114 = vst [vmem:[%s279 + $0x328] sm:$0xff] %v718
        %1115 = vst [vmem:[%s279 + $0x330] sm:$0xff] %v973
        %1116 = vst [vmem:[%s279 + $0x338] sm:$0xff] %v975
        %1117 = vst [vmem:[%s279 + $0x340] sm:$0xff] %v722
        %1118 = vst [vmem:[%s279 + $0x348] sm:$0xff] %v724
        %1119 = vst [vmem:[%s279 + $0x350] sm:$0xff] %v979
        %1120 = vst [vmem:[%s279 + $0x358] sm:$0xff] %v981
        %1121 = vst [vmem:[%s279 + $0x360] sm:$0xff] %v728
        %1122 = vst [vmem:[%s279 + $0x368] sm:$0xff] %v730
        %1123 = vst [vmem:[%s279 + $0x370] sm:$0xff] %v985
        %1124 = vst [vmem:[%s279 + $0x378] sm:$0xff] %v987
        %1125 = vst [vmem:[%s279 + $0x380] sm:$0xff] %v734
        %1126 = vst [vmem:[%s279 + $0x388] sm:$0xff] %v736
        %1127 = vst [vmem:[%s279 + $0x390] sm:$0xff] %v991
        %1128 = vst [vmem:[%s279 + $0x398] sm:$0xff] %v993
        %1129 = vst [vmem:[%s279 + $0x3a0] sm:$0xff] %v740
        %1130 = vst [vmem:[%s279 + $0x3a8] sm:$0xff] %v742
        %1131 = vst [vmem:[%s279 + $0x3b0] sm:$0xff] %v997
        %1132 = vst [vmem:[%s279 + $0x3b8] sm:$0xff] %v999
        %1133 = vst [vmem:[%s279 + $0x3c0] sm:$0xff] %v746
        %1134 = vst [vmem:[%s279 + $0x3c8] sm:$0xff] %v748
        %1135 = vst [vmem:[%s279 + $0x3d0] sm:$0xff] %v1003
        %1136 = vst [vmem:[%s279 + $0x3d8] sm:$0xff] %v1005
        %1137 = vst [vmem:[%s279 + $0x3e0] sm:$0xff] %v752
        %1138 = vst [vmem:[%s279 + $0x3e8] sm:$0xff] %v754
        %1139 = vst [vmem:[%s279 + $0x3f0] sm:$0xff] %v1009
        %1140 = vst [vmem:[%s279 + $0x3f8] sm:$0xff] %v1011
        %s1141 = sand.u32 %s123, 1
        %s1142 = scalar_lea.sflag [#allocation4], %s1141
        %s1143 = sand.u32 %s123, 1
        %s1144 = smul.addr %s1143, 1024
        %s1145 = scalar_lea.vmem [#allocation8], %s1144
        // Predicated region
        $region45: #{linear_decoder.1} parent=31 // pred_check
          %p1146 = pneg %p133
        $region46: #{linear_decoder.1} parent=31 // pred_check_branch
          %1148 = sbr.rel (%p1146) target = $region48
        $region47: #{linear_decoder.1} parent=31 // pred_region
          %s1149 = smul.u32 32, %s28
          %s1150 = smul.u32 4, %s27
          %s1152 = ssub.s32 16384, 16384
          %1153 = vsyncadd %s1142, %s1152
          %s1154 = smul.addr %s1149, 8
          %s1155 = sadd.s32 %s1150, %s1154
          %s1156 = smul.addr %s1155, 128
          %s1157 = scalar_lea.hbm %s3, %s1156
          %s1158 = sshll.u32 %s1145, 4
          %s1159 = int_to_ptr.vmem [resolvable:$true] %s1158
          %1164 = dma.vmem_to_hbm [thread:$0]  %s1159, 16384, %s1157, %s1142, 512, 1024, 32
        $region48: #{linear_decoder.1} parent=31 // pred_fallthru
          _
      $region32: #{linear_decoder.1} parent=5 // pred_fallthru
        _
      %p1165 = scmp.le.s32.totalorder 2, %s18
      // Predicated region
      $region49: #{linear_decoder.1} parent=5 // pred_check
        %p1166 = pneg %p1165
      $region50: #{linear_decoder.1} parent=5 // pred_check_branch
        %1168 = sbr.rel (%p1166) target = $region52
      $region51: #{linear_decoder.1} parent=5 // pred_region
        %s1169 = ssub.s32 %s18, 2
        // Predicated region
        $region53: #{linear_decoder.1} parent=51 // pred_check
          %p1170 = pneg %p139
        $region54: #{linear_decoder.1} parent=51 // pred_check_branch
          %1172 = sbr.rel (%p1170) target = $region56
        $region55: #{linear_decoder.1} parent=51 // pred_region
          %s1173 = sand.u32 %s124, 1
          %s1174 = scalar_lea.sflag [#allocation4], %s1173
          %s1175 = sand.u32 %s124, 1
          %s1176 = smul.addr %s1175, 1024
          %s1177 = scalar_lea.vmem [#allocation8], %s1176
          %1178 = dma.done %s1174, 16384
        $region56: #{linear_decoder.1} parent=51 // pred_fallthru
          _
      $region52: #{linear_decoder.1} parent=5 // pred_fallthru
        _
    $region6: #{linear_decoder.1} parent=1 // loop_footer
      %s22 = sadd.s32 1, %s18
    $region7: #{linear_decoder.1} parent=1 // loop_footer_branch
      %17 = sbr.rel target = $region3
    $region8: #{linear_decoder.1} parent=1 // loop_exit
      _
    %1179 = vsyncpa [#allocation3], 1
    %s1180 = scalar_lea.sflag [#allocation3], 1
    %1181 = vsyncpa %s1180, 1
    %1182 = vsyncpa [#allocation6], 1
    %s1183 = scalar_lea.sflag [#allocation6], 1
    %1184 = vsyncpa %s1183, 1
    %1185 = vsyncpa [#allocation4], 1
    %s1186 = scalar_lea.sflag [#allocation4], 1
    %1187 = vsyncpa %s1186, 1

</llo_original>
